<compile_context>
chip_gen: v7x
topology: tpu7x:2x2x1
jax: 0.10.0
libtpu: 0.0.40
codegen_flags: <defaults>
</compile_context>

<pallas_src>
import jax
import jax.numpy as jnp
from jax.experimental import pallas as pl
from jax.experimental.pallas import tpu as pltpu


def _round_up(x: int, m: int) -> int:
    return ((x + m - 1) // m) * m


def _lm_head_kernel(x_ref, w1_ref, b1_ref, w2_ref, b2_ref, o_ref, h_ref):
    # x_ref  : (tm, Hp)   activation row tile (native dtype -> MXU directly)
    # w1_ref : (Hp, Hp)   first-layer weight, (in, out) layout, constant block index
    # b1_ref : (1, Hp)
    # w2_ref : (Hp, tn)   second-layer weight tile, streamed over the vocab axis
    # b2_ref : (1, tn)    bias tile matching the vocab tile
    # o_ref  : (tm, tn)   lane-dense output tile
    # h_ref  : (tm, Hp)   VMEM scratch: relu(x @ W1 + b1), reused across vocab tiles

    # First GEMM + bias + ReLU only once per row tile (innermost axis == vocab).
    @pl.when(pl.program_id(1) == 0)
    def _():
        h = jnp.dot(x_ref[...], w1_ref[...], preferred_element_type=jnp.float32)
        h = jnp.maximum(h + b1_ref[...].astype(jnp.float32), 0.0)
        h_ref[...] = h.astype(h_ref.dtype)

    # Second GEMM against the streamed vocab tile of W2; f32 accumulate, add bias,
    # single downcast on the way out.
    out = jnp.dot(h_ref[...], w2_ref[...], preferred_element_type=jnp.float32)
    out = out + b2_ref[...].astype(jnp.float32)
    o_ref[...] = out.astype(o_ref.dtype)


def lm_predict_head_2d(x, w1, b1, w2, b2, *, tile_m=256, tile_v=512,
                       vmem_limit_bytes=None):
    """Fused LM head on flattened activations.

    x : (M, H)            activations (f32 or bf16)
    w1: (H, H), b1: (H,)  first Linear, weight stored as (in, out)
    w2: (H, V), b2: (V,)  second Linear, weight stored as (in, out)
    Returns (M, V) in x.dtype.
    """
    M, H = x.shape
    H2, V = w2.shape
    assert w1.shape == (H, H) and b1.shape == (H,)
    assert H2 == H and b2.shape == (V,)

    # ---- padded / tiled sizes (lane = 128, sublane = 8) ----------------------
    Hp = max(_round_up(H, 128), 128)
    tm = min(tile_m, _round_up(M, 8))               # row tile (multiple of 8)
    Mp = _round_up(M, tm)
    tn = min(tile_v, max(_round_up(V, 128), 128))   # vocab tile (multiple of 128)
    Vp = _round_up(max(V, 128), tn)

    # ---- wrapper-side zero padding (sliced off on return) --------------------
    xp = x if (Mp == M and Hp == H) else jnp.pad(x, ((0, Mp - M), (0, Hp - H)))
    w1p = w1 if Hp == H else jnp.pad(w1, ((0, Hp - H), (0, Hp - H)))
    b1p = (b1 if Hp == H else jnp.pad(b1, (0, Hp - H))).reshape(1, Hp)
    w2p = w2 if (Hp == H and Vp == V) else jnp.pad(w2, ((0, Hp - H), (0, Vp - V)))
    b2p = (b2 if Vp == V else jnp.pad(b2, (0, Vp - V))).reshape(1, Vp)

    # Keep the cached first-GEMM result in the activation dtype so the second
    # matmul stays on the fast (bf16) MXU path when inputs are bf16.
    h_dtype = x.dtype

    grid = (Mp // tm, Vp // tn)

    # Rough VMEM estimate (double-buffered streamed blocks + resident W1 + scratch).
    isz = jnp.dtype(x.dtype).itemsize
    wsz = jnp.dtype(w1.dtype).itemsize
    est = 2 * isz * (tm * Hp + tm * tn)             # x tile + out tile
    est += 2 * wsz * (Hp * tn + tn)                 # streamed W2 tile + b2 tile
    est += 2 * wsz * (Hp * Hp + Hp)                 # W1 + b1 (constant index)
    est += tm * Hp * jnp.dtype(h_dtype).itemsize    # h scratch
    if vmem_limit_bytes is None:
        vmem_limit_bytes = int(min(max(2 * est, 32 * 1024 * 1024),
                                   60 * 1024 * 1024))

    # Advisory cost hint for the XLA scheduler around the custom call.
    cost = pl.CostEstimate(
        flops=2 * Mp * Hp * Hp + 2 * Mp * Hp * Vp,
        transcendentals=0,
        bytes_accessed=(Mp * Hp + Hp * Hp + Hp * Vp + Mp * Vp) * isz,
    )

    out = pl.pallas_call(
        _lm_head_kernel,
        out_shape=jax.ShapeDtypeStruct((Mp, Vp), x.dtype),
        grid_spec=pltpu.PrefetchScalarGridSpec(
            num_scalar_prefetch=0,
            grid=grid,
            in_specs=[
                pl.BlockSpec((tm, Hp), lambda i, j: (i, 0)),   # x row tile
                pl.BlockSpec((Hp, Hp), lambda i, j: (0, 0)),   # W1 (constant index)
                pl.BlockSpec((1, Hp), lambda i, j: (0, 0)),    # b1
                pl.BlockSpec((Hp, tn), lambda i, j: (0, j)),   # W2 vocab tile (streamed)
                pl.BlockSpec((1, tn), lambda i, j: (0, j)),    # b2 vocab tile
            ],
            out_specs=pl.BlockSpec((tm, tn), lambda i, j: (i, j)),
            scratch_shapes=[pltpu.VMEM((tm, Hp), h_dtype)],    # cached relu(xW1+b1)
        ),
        compiler_params=pltpu.CompilerParams(
            # rows shard across cores; vocab axis is sequential so the h scratch
            # written at j == 0 is valid for every vocab tile of that row tile.
            dimension_semantics=("parallel", "arbitrary"),
            vmem_limit_bytes=vmem_limit_bytes,
        ),
        cost_estimate=cost,
    )(xp, w1p, b1p, w2p, b2p)

    return out[:M, :V]


def lm_predict_head(x, w1, b1, w2, b2, **kw):
    """Module-level forward: accepts (..., H) and returns (..., V), like the
    PyTorch LMPredictHead."""
    lead = x.shape[:-1]
    H = x.shape[-1]
    V = w2.shape[-1]
    x2d = x.reshape(-1, H)
    out = lm_predict_head_2d(x2d, w1, b1, w2, b2, **kw)
    return out.reshape(*lead, V)


def lm_predict_head_ref(x, w1, b1, w2, b2):
    h = jnp.maximum(x @ w1 + b1, 0.0)
    return h @ w2 + b2


if __name__ == "__main__":
    # Small config consistent with the module: hidden_dim=32, vocab_size=64.
    batch, seq, hidden, vocab = 2, 8, 32, 64

    key = jax.random.PRNGKey(0)
    kx, kw1, kb1, kw2, kb2 = jax.random.split(key, 5)

    x = jax.random.normal(kx, (batch, seq, hidden), dtype=jnp.float32)
    # PyTorch Linear weights are (out, in); stored here pre-transposed as (in, out).
    w1 = jax.random.normal(kw1, (hidden, hidden), dtype=jnp.float32) * 0.1
    b1 = jax.random.normal(kb1, (hidden,), dtype=jnp.float32) * 0.1
    w2 = jax.random.normal(kw2, (hidden, vocab), dtype=jnp.float32) * 0.1
    b2 = jax.random.normal(kb2, (vocab,), dtype=jnp.float32) * 0.1

    out = lm_predict_head(x, w1, b1, w2, b2)
    out = jax.block_until_ready(out)

    ref = lm_predict_head_ref(x.reshape(batch * seq, hidden), w1, b1, w2, b2)
    ref = ref.reshape(batch, seq, vocab)

    assert out.shape == (batch, seq, vocab)
    assert jnp.allclose(out, ref, atol=1e-4, rtol=1e-4), "mismatch vs reference"

    print("KERNEL_OK")
</pallas_src>

<mosaic_0001>
module attributes {stable_mosaic.version = 11 : i64} {
  func.func @_lm_head_kernel(%arg0: i32, %arg1: i32, %arg2: memref<16x128xf32, #tpu.memory_space<vmem>>, %arg3: memref<128x128xf32, #tpu.memory_space<vmem>>, %arg4: memref<1x128xf32, #tpu.memory_space<vmem>>, %arg5: memref<128x128xf32, #tpu.memory_space<vmem>>, %arg6: memref<1x128xf32, #tpu.memory_space<vmem>>, %arg7: memref<16x128xf32, #tpu.memory_space<vmem>>, %arg8: memref<16x128xf32, #tpu.memory_space<vmem>>) attributes {dimension_semantics = [#tpu.dimension_semantics<parallel>, #tpu.dimension_semantics<arbitrary>], iteration_bounds = array<i64: 1, 1>, scalar_prefetch = 0 : i64, scratch_operands = 1 : i64, tpu.core_type = #tpu.core_type<tc>, window_params = [{transform_indices = @transform_0, window_bounds = array<i64: 16, 128>}, {pipeline_mode = #tpu.pipeline_mode<synchronous>, transform_indices = @transform_1, window_bounds = array<i64: 128, 128>}, {pipeline_mode = #tpu.pipeline_mode<synchronous>, transform_indices = @transform_2, window_bounds = array<i64: 1, 128>}, {transform_indices = @transform_3, window_bounds = array<i64: 128, 128>}, {transform_indices = @transform_4, window_bounds = array<i64: 1, 128>}, {transform_indices = @transform_5, window_bounds = array<i64: 16, 128>}]} {
    %c0_i32 = arith.constant 0 : i32
    %0 = arith.cmpi eq, %arg1, %c0_i32 : i32
    %1 = arith.extui %0 : i1 to i32
    %c0_i32_0 = arith.constant 0 : i32
    %2 = arith.cmpi ne, %1, %c0_i32_0 : i32
    scf.if %2 {
      %c0_8 = arith.constant 0 : index
      %c0_9 = arith.constant 0 : index
      %10 = vector.load %arg2[%c0_8, %c0_9] : memref<16x128xf32, #tpu.memory_space<vmem>>, vector<16x128xf32>
      %c0_10 = arith.constant 0 : index
      %c0_11 = arith.constant 0 : index
      %11 = vector.load %arg3[%c0_10, %c0_11] : memref<128x128xf32, #tpu.memory_space<vmem>>, vector<128x128xf32>
      %cst_12 = arith.constant dense<0.000000e+00> : vector<16x128xf32>
      %12 = tpu.matmul %10, %11, %cst_12 {dimension_numbers = #tpu.dot_dimension_numbers<[1], [0], [0], [1], [0, 0, 1, 1], [], []>} : vector<16x128xf32>, vector<128x128xf32>, vector<16x128xf32> -> vector<16x128xf32>
      %c0_13 = arith.constant 0 : index
      %c0_14 = arith.constant 0 : index
      %13 = vector.load %arg4[%c0_13, %c0_14] : memref<1x128xf32, #tpu.memory_space<vmem>>, vector<1x128xf32>
      %14 = vector.broadcast %13 : vector<1x128xf32> to vector<16x128xf32>
      %15 = arith.addf %12, %14 : vector<16x128xf32>
      %cst_15 = arith.constant 0.000000e+00 : f32
      %16 = vector.broadcast %cst_15 : f32 to vector<16x128xf32>
      %17 = arith.maximumf %15, %16 : vector<16x128xf32>
      %c0_16 = arith.constant 0 : index
      %c0_17 = arith.constant 0 : index
      %18 = vector.load %arg8[%c0_16, %c0_17] : memref<16x128xf32, #tpu.memory_space<vmem>>, vector<16x128xf32>
      tpu.vector_store %arg8[%c0_16, %c0_17], %17 {strides = array<i32>} : memref<16x128xf32, #tpu.memory_space<vmem>>, vector<16x128xf32>,
    } else {
    }
    %c0 = arith.constant 0 : index
    %c0_1 = arith.constant 0 : index
    %3 = vector.load %arg8[%c0, %c0_1] : memref<16x128xf32, #tpu.memory_space<vmem>>, vector<16x128xf32>
    %c0_2 = arith.constant 0 : index
    %c0_3 = arith.constant 0 : index
    %4 = vector.load %arg5[%c0_2, %c0_3] : memref<128x128xf32, #tpu.memory_space<vmem>>, vector<128x128xf32>
    %cst = arith.constant dense<0.000000e+00> : vector<16x128xf32>
    %5 = tpu.matmul %3, %4, %cst {dimension_numbers = #tpu.dot_dimension_numbers<[1], [0], [0], [1], [0, 0, 1, 1], [], []>} : vector<16x128xf32>, vector<128x128xf32>, vector<16x128xf32> -> vector<16x128xf32>
    %c0_4 = arith.constant 0 : index
    %c0_5 = arith.constant 0 : index
    %6 = vector.load %arg6[%c0_4, %c0_5] : memref<1x128xf32, #tpu.memory_space<vmem>>, vector<1x128xf32>
    %7 = vector.broadcast %6 : vector<1x128xf32> to vector<16x128xf32>
    %8 = arith.addf %5, %7 : vector<16x128xf32>
    %c0_6 = arith.constant 0 : index
    %c0_7 = arith.constant 0 : index
    %9 = vector.load %arg7[%c0_6, %c0_7] : memref<16x128xf32, #tpu.memory_space<vmem>>, vector<16x128xf32>
    tpu.vector_store %arg7[%c0_6, %c0_7], %8 {strides = array<i32>} : memref<16x128xf32, #tpu.memory_space<vmem>>, vector<16x128xf32>,
    return
  }
  func.func @transform_0(%arg0: i32, %arg1: i32) -> (i32, i32) {
    %c0_i32 = arith.constant 0 : i32
    %c0_i32_0 = arith.constant 0 : i32
    return %arg0, %c0_i32 : i32, i32
  }
  func.func @transform_1(%arg0: i32, %arg1: i32) -> (i32, i32) {
    %c0_i32 = arith.constant 0 : i32
    %c0_i32_0 = arith.constant 0 : i32
    %c0_i32_1 = arith.constant 0 : i32
    return %c0_i32, %c0_i32_0 : i32, i32
  }
  func.func @transform_2(%arg0: i32, %arg1: i32) -> (i32, i32) {
    %c0_i32 = arith.constant 0 : i32
    %c0_i32_0 = arith.constant 0 : i32
    %c0_i32_1 = arith.constant 0 : i32
    return %c0_i32, %c0_i32_0 : i32, i32
  }
  func.func @transform_3(%arg0: i32, %arg1: i32) -> (i32, i32) {
    %c0_i32 = arith.constant 0 : i32
    %c0_i32_0 = arith.constant 0 : i32
    return %c0_i32, %arg1 : i32, i32
  }
  func.func @transform_4(%arg0: i32, %arg1: i32) -> (i32, i32) {
    %c0_i32 = arith.constant 0 : i32
    %c0_i32_0 = arith.constant 0 : i32
    return %c0_i32, %arg1 : i32, i32
  }
  func.func @transform_5(%arg0: i32, %arg1: i32) -> (i32, i32) {
    %c0_i32 = arith.constant 0 : i32
    return %arg0, %arg1 : i32, i32
  }
}

</mosaic_0001>

<llo_original>
// kernel: tpu_custom_call.1
$region0: #{tpu_custom_call.1}
  #allocation0 [shape = 'u32[]', space=smem, size = 0x4, offset = 0x4, fixed_abs, tag = 'smem constant byte address 0x4 - core index']
  #allocation1 [shape = 'u32[144,128]{1,0:T(1,128)}', space=vmem, size = 0x12000, scoped, tag = 'internal scratch']
  #allocation2 [shape = 'f32[16,128]{1,0:T(8,128)}', space=vmem, size = 0x2000, scoped, tag = 'scratch operand']
  %s0 = inlined_call_operand.hbm [shape: f32[16,128], index: 0, kind: input, shape index: {}]
  %s1 = inlined_call_operand.hbm [shape: f32[128,128], index: 1, kind: input, shape index: {}]
  %s2 = inlined_call_operand.vmem [shape: f32[1,128], index: 2, kind: input, shape index: {}]
  %s3 = inlined_call_operand.hbm [shape: f32[128,128], index: 3, kind: input, shape index: {}]
  %s4 = inlined_call_operand.vmem [shape: f32[1,128], index: 4, kind: input, shape index: {}]
  %s5 = inlined_call_operand.hbm [shape: f32[16,128], index: 5, kind: output, shape index: {}]
  %s6 = sld [smem:[#allocation0]]
  $region46: #{tpu_custom_call.1} parent=0
    _
  %s8 = ssub.s32 1, %s6
  %s9 = scalar_select 0, %s8, %s6
  $region1: #{tpu_custom_call.1} parent=0
    #allocation3 [shape = 'u8[8192]{0}', space=vmem, size = 0x2000, scoped, tag = 'input window, operand 0, single buffered']
    #allocation4 [shape = 's32[1]{0}', space=sflag, size = 0x4, scoped, tag = 'scoped memory for tpu_custom_call.1']
    #allocation5 [shape = 's32[1]{0}', space=sflag, size = 0x4, scoped, tag = 'scoped memory for tpu_custom_call.1']
    #allocation6 [shape = 'u8[65536]{0}', space=vmem, size = 0x10000, scoped, tag = 'input window, operand 1, single buffered']
    #allocation7 [shape = 's32[1]{0}', space=sflag, size = 0x4, scoped, tag = 'scoped memory for tpu_custom_call.1']
    #allocation8 [shape = 'u8[65536]{0}', space=vmem, size = 0x10000, scoped, tag = 'input window, operand 3, single buffered']
    #allocation9 [shape = 'u8[8192]{0}', space=vmem, size = 0x2000, scoped, tag = 'output window, operand 0, single buffered']
    %10 = vsyncpa [#allocation4], 0
    %11 = vsyncpa [#allocation7], 0
    %12 = vsyncpa [#allocation5], 0
    // Predicated region
    $region2: #{tpu_custom_call.1} parent=1 // pred_check
      _
    $region3: #{tpu_custom_call.1} parent=1 // pred_check_branch
      %14 = sbr.rel (0) target = $region5
    $region4: #{tpu_custom_call.1} parent=1 // pred_region
      %s16 = ssub.s32 256, 256
      %17 = vsyncadd [#allocation4], %s16
      %s18 = sshll.u32 [#allocation3], 4
      %s19 = int_to_ptr.vmem [resolvable:$true] %s18
      %24 = dma.hbm_to_vmem [thread:$0]  %s0, 256, %s19, [#allocation4], 128, 128, 8
    $region5: #{tpu_custom_call.1} parent=1 // pred_fallthru
      _
    // Predicated region
    $region6: #{tpu_custom_call.1} parent=1 // pred_check
      _
    $region7: #{tpu_custom_call.1} parent=1 // pred_check_branch
      %26 = sbr.rel (0) target = $region9
    $region8: #{tpu_custom_call.1} parent=1 // pred_region
      %s28 = ssub.s32 2048, 2048
      %29 = vsyncadd [#allocation7], %s28
      %s30 = sshll.u32 [#allocation6], 4
      %s31 = int_to_ptr.vmem [resolvable:$true] %s30
      %36 = dma.hbm_to_vmem [thread:$0]  %s1, 2048, %s31, [#allocation7], 128, 128, 8
    $region9: #{tpu_custom_call.1} parent=1 // pred_fallthru
      _
    // Predicated region
    $region10: #{tpu_custom_call.1} parent=1 // pred_check
      _
    $region11: #{tpu_custom_call.1} parent=1 // pred_check_branch
      %38 = sbr.rel (0) target = $region13
    $region12: #{tpu_custom_call.1} parent=1 // pred_region
      _
    $region13: #{tpu_custom_call.1} parent=1 // pred_fallthru
      _
    // Predicated region
    $region14: #{tpu_custom_call.1} parent=1 // pred_check
      _
    $region15: #{tpu_custom_call.1} parent=1 // pred_check_branch
      %40 = sbr.rel (0) target = $region17
    $region16: #{tpu_custom_call.1} parent=1 // pred_region
      %s42 = ssub.s32 2048, 2048
      %43 = vsyncadd [#allocation7], %s42
      %s44 = sshll.u32 [#allocation8], 4
      %s45 = int_to_ptr.vmem [resolvable:$true] %s44
      %50 = dma.hbm_to_vmem [thread:$0]  %s3, 2048, %s45, [#allocation7], 128, 128, 8
    $region17: #{tpu_custom_call.1} parent=1 // pred_fallthru
      _
    // Predicated region
    $region18: #{tpu_custom_call.1} parent=1 // pred_check
      _
    $region19: #{tpu_custom_call.1} parent=1 // pred_check_branch
      %52 = sbr.rel (0) target = $region21
    $region20: #{tpu_custom_call.1} parent=1 // pred_region
      _
    $region21: #{tpu_custom_call.1} parent=1 // pred_fallthru
      _
    // Predicated region
    $region22: #{tpu_custom_call.1} parent=1 // pred_check
      _
    $region23: #{tpu_custom_call.1} parent=1 // pred_check_branch
      %54 = sbr.rel (0) target = $region25
    $region24: #{tpu_custom_call.1} parent=1 // pred_region
      %55 = dma.done [#allocation4], 256
    $region25: #{tpu_custom_call.1} parent=1 // pred_fallthru
      _
    // Predicated region
    $region26: #{tpu_custom_call.1} parent=1 // pred_check
      _
    $region27: #{tpu_custom_call.1} parent=1 // pred_check_branch
      %57 = sbr.rel (0) target = $region29
    $region28: #{tpu_custom_call.1} parent=1 // pred_region
      %58 = dma.done [#allocation7], 2048
    $region29: #{tpu_custom_call.1} parent=1 // pred_fallthru
      _
    // Predicated region
    $region30: #{tpu_custom_call.1} parent=1 // pred_check
      _
    $region31: #{tpu_custom_call.1} parent=1 // pred_check_branch
      %60 = sbr.rel (0) target = $region33
    $region32: #{tpu_custom_call.1} parent=1 // pred_region
      %61 = dma.done [#allocation7], 2048
    $region33: #{tpu_custom_call.1} parent=1 // pred_fallthru
      _
    %p62 = scmp.eq.s32.totalorder 0, 0
    // Predicated region
    $region34: #{tpu_custom_call.1} parent=1 // pred_check
      %p63 = pneg %p62
    $region35: #{tpu_custom_call.1} parent=1 // pred_check_branch
      %65 = sbr.rel (%p63) target = $region37
    $region36: #{tpu_custom_call.1} parent=1 // pred_region
      %v66 = vld [vmem:[#allocation3] sm:$0xff]
      %v67 = vld [vmem:[#allocation3 + $0x8] sm:$0xff]
      %v68 = vld [vmem:[#allocation6] sm:$0xff]
      %v69 = vld [vmem:[#allocation6 + $0x8] sm:$0xff]
      %v70 = vld [vmem:[#allocation6 + $0x10] sm:$0xff]
      %v71 = vld [vmem:[#allocation6 + $0x18] sm:$0xff]
      %v72 = vld [vmem:[#allocation6 + $0x20] sm:$0xff]
      %v73 = vld [vmem:[#allocation6 + $0x28] sm:$0xff]
      %v74 = vld [vmem:[#allocation6 + $0x30] sm:$0xff]
      %v75 = vld [vmem:[#allocation6 + $0x38] sm:$0xff]
      %v76 = vld [vmem:[#allocation6 + $0x40] sm:$0xff]
      %v77 = vld [vmem:[#allocation6 + $0x48] sm:$0xff]
      %v78 = vld [vmem:[#allocation6 + $0x50] sm:$0xff]
      %v79 = vld [vmem:[#allocation6 + $0x58] sm:$0xff]
      %v80 = vld [vmem:[#allocation6 + $0x60] sm:$0xff]
      %v81 = vld [vmem:[#allocation6 + $0x68] sm:$0xff]
      %v82 = vld [vmem:[#allocation6 + $0x70] sm:$0xff]
      %v83 = vld [vmem:[#allocation6 + $0x78] sm:$0xff]
      %v84 = vld [vmem:[%s2] sm:$0x1]
      %v86 = vlaneseq
      %v87 = vshrl.u32 %v86, 7
      %v88 = vsub.s32 0, %v87
      %v89 = vrot.slane %v84, %v88
      %91 = vmatprep.subr.mxu0 0.0
      %92 = vmatpush1.msra.mxu0 %v68
      %93 = vmatprep.subr.mxu0 0.0
      %94 = vmatpush1.msra.mxu0 %v69
      %95 = vmatprep.subr.mxu0 0.0
      %96 = vmatpush1.msra.mxu0 %v70
      %97 = vmatprep.subr.mxu0 0.0
      %98 = vmatpush1.msra.mxu0 %v71
      %99 = vmatprep.subr.mxu0 0.0
      %100 = vmatpush1.msra.mxu0 %v72
      %101 = vmatprep.subr.mxu0 0.0
      %102 = vmatpush1.msra.mxu0 %v73
      %103 = vmatprep.subr.mxu0 0.0
      %104 = vmatpush1.msra.mxu0 %v74
      %105 = vmatprep.subr.mxu0 0.0
      %106 = vmatpush1.msra.mxu0 %v75
      %107 = vmatprep.subr.mxu0 0.0
      %108 = vmatpush1.msra.mxu0 %v76
      %109 = vmatprep.subr.mxu0 0.0
      %110 = vmatpush1.msra.mxu0 %v77
      %111 = vmatprep.subr.mxu0 0.0
      %112 = vmatpush1.msra.mxu0 %v78
      %113 = vmatprep.subr.mxu0 0.0
      %114 = vmatpush1.msra.mxu0 %v79
      %115 = vmatprep.subr.mxu0 0.0
      %116 = vmatpush1.msra.mxu0 %v80
      %117 = vmatprep.subr.mxu0 0.0
      %118 = vmatpush1.msra.mxu0 %v81
      %119 = vmatprep.subr.mxu0 0.0
      %120 = vmatpush1.msra.mxu0 %v82
      %121 = vmatprep.subr.mxu0 0.0
      %122 = vmatpush1.msra.mxu0 %v83
      %123 = vmatprep.subr.mxu0 0.0
      %124 = vmatpush1.msra.mxu0 0.0
      %125 = vmatprep.subr.mxu0 0.0
      %126 = vmatpush1.msra.mxu0 0.0
      %127 = vmatprep.subr.mxu0 0.0
      %128 = vmatpush1.msra.mxu0 0.0
      %129 = vmatprep.subr.mxu0 0.0
      %130 = vmatpush1.msra.mxu0 0.0
      %131 = vmatprep.subr.mxu0 0.0
      %132 = vmatpush1.msra.mxu0 0.0
      %133 = vmatprep.subr.mxu0 0.0
      %134 = vmatpush1.msra.mxu0 0.0
      %135 = vmatprep.subr.mxu0 0.0
      %136 = vmatpush1.msra.mxu0 0.0
      %137 = vmatprep.subr.mxu0 0.0
      %138 = vmatpush1.msra.mxu0 0.0
      %139 = vmatprep.subr.mxu0 0.0
      %140 = vmatpush1.msra.mxu0 0.0
      %141 = vmatprep.subr.mxu0 0.0
      %142 = vmatpush1.msra.mxu0 0.0
      %143 = vmatprep.subr.mxu0 0.0
      %144 = vmatpush1.msra.mxu0 0.0
      %145 = vmatprep.subr.mxu0 0.0
      %146 = vmatpush1.msra.mxu0 0.0
      %147 = vmatprep.subr.mxu0 0.0
      %148 = vmatpush1.msra.mxu0 0.0
      %149 = vmatprep.subr.mxu0 0.0
      %150 = vmatpush1.msra.mxu0 0.0
      %151 = vmatprep.subr.mxu0 0.0
      %152 = vmatpush1.msra.mxu0 0.0
      %153 = vmatprep.subr.mxu0 0.0
      %154 = vmatpush1.msra.mxu0 0.0
      %155 = vmatprep.mubr.f32.mxu0 0.0
      %156 = vmatmul.mubr.f32.gmra.mrb[0].mxu0 %v66
      %v157 = vpop.f32.mrb[0].mxu0
      %v158 = vadd.f32 %v89, %v157
      %v159 = vpop.f32.mrb[0].mxu0
      %160 = vmatprep.mubr.f32.mxu0 0.0
      %161 = vmatmul.mubr.f32.gmra.mrb[0].mxu0 %v67
      %v162 = vpop.f32.mrb[0].mxu0
      %v163 = vadd.f32 %v89, %v162
      %v164 = vpop.f32.mrb[0].mxu0
      %165 = vdwg.mxu0
      %v166 = vmax.f32 %v158, 0.0
      %v167 = vmax.f32 %v163, 0.0
      %168 = vst [vmem:[#allocation2] sm:$0xff] %v166
      %169 = vst [vmem:[#allocation2 + $0x8] sm:$0xff] %v167
    $region37: #{tpu_custom_call.1} parent=1 // pred_fallthru
      _
    %v170 = vld [vmem:[#allocation2] sm:$0xff]
    %v171 = vld [vmem:[#allocation2 + $0x8] sm:$0xff]
    %v172 = vld [vmem:[#allocation8] sm:$0xff]
    %v173 = vld [vmem:[#allocation8 + $0x8] sm:$0xff]
    %v174 = vld [vmem:[#allocation8 + $0x10] sm:$0xff]
    %v175 = vld [vmem:[#allocation8 + $0x18] sm:$0xff]
    %v176 = vld [vmem:[#allocation8 + $0x20] sm:$0xff]
    %v177 = vld [vmem:[#allocation8 + $0x28] sm:$0xff]
    %v178 = vld [vmem:[#allocation8 + $0x30] sm:$0xff]
    %v179 = vld [vmem:[#allocation8 + $0x38] sm:$0xff]
    %v180 = vld [vmem:[#allocation8 + $0x40] sm:$0xff]
    %v181 = vld [vmem:[#allocation8 + $0x48] sm:$0xff]
    %v182 = vld [vmem:[#allocation8 + $0x50] sm:$0xff]
    %v183 = vld [vmem:[#allocation8 + $0x58] sm:$0xff]
    %v184 = vld [vmem:[#allocation8 + $0x60] sm:$0xff]
    %v185 = vld [vmem:[#allocation8 + $0x68] sm:$0xff]
    %v186 = vld [vmem:[#allocation8 + $0x70] sm:$0xff]
    %v187 = vld [vmem:[#allocation8 + $0x78] sm:$0xff]
    %v188 = vld [vmem:[%s4] sm:$0x1]
    %v190 = vlaneseq
    %v191 = vshrl.u32 %v190, 7
    %v192 = vsub.s32 0, %v191
    %v193 = vrot.slane %v188, %v192
    %195 = vmatprep.subr.mxu0 0.0
    %196 = vmatpush1.msra.mxu0 %v172
    %197 = vmatprep.subr.mxu0 0.0
    %198 = vmatpush1.msra.mxu0 %v173
    %199 = vmatprep.subr.mxu0 0.0
    %200 = vmatpush1.msra.mxu0 %v174
    %201 = vmatprep.subr.mxu0 0.0
    %202 = vmatpush1.msra.mxu0 %v175
    %203 = vmatprep.subr.mxu0 0.0
    %204 = vmatpush1.msra.mxu0 %v176
    %205 = vmatprep.subr.mxu0 0.0
    %206 = vmatpush1.msra.mxu0 %v177
    %207 = vmatprep.subr.mxu0 0.0
    %208 = vmatpush1.msra.mxu0 %v178
    %209 = vmatprep.subr.mxu0 0.0
    %210 = vmatpush1.msra.mxu0 %v179
    %211 = vmatprep.subr.mxu0 0.0
    %212 = vmatpush1.msra.mxu0 %v180
    %213 = vmatprep.subr.mxu0 0.0
    %214 = vmatpush1.msra.mxu0 %v181
    %215 = vmatprep.subr.mxu0 0.0
    %216 = vmatpush1.msra.mxu0 %v182
    %217 = vmatprep.subr.mxu0 0.0
    %218 = vmatpush1.msra.mxu0 %v183
    %219 = vmatprep.subr.mxu0 0.0
    %220 = vmatpush1.msra.mxu0 %v184
    %221 = vmatprep.subr.mxu0 0.0
    %222 = vmatpush1.msra.mxu0 %v185
    %223 = vmatprep.subr.mxu0 0.0
    %224 = vmatpush1.msra.mxu0 %v186
    %225 = vmatprep.subr.mxu0 0.0
    %226 = vmatpush1.msra.mxu0 %v187
    %227 = vmatprep.subr.mxu0 0.0
    %228 = vmatpush1.msra.mxu0 0.0
    %229 = vmatprep.subr.mxu0 0.0
    %230 = vmatpush1.msra.mxu0 0.0
    %231 = vmatprep.subr.mxu0 0.0
    %232 = vmatpush1.msra.mxu0 0.0
    %233 = vmatprep.subr.mxu0 0.0
    %234 = vmatpush1.msra.mxu0 0.0
    %235 = vmatprep.subr.mxu0 0.0
    %236 = vmatpush1.msra.mxu0 0.0
    %237 = vmatprep.subr.mxu0 0.0
    %238 = vmatpush1.msra.mxu0 0.0
    %239 = vmatprep.subr.mxu0 0.0
    %240 = vmatpush1.msra.mxu0 0.0
    %241 = vmatprep.subr.mxu0 0.0
    %242 = vmatpush1.msra.mxu0 0.0
    %243 = vmatprep.subr.mxu0 0.0
    %244 = vmatpush1.msra.mxu0 0.0
    %245 = vmatprep.subr.mxu0 0.0
    %246 = vmatpush1.msra.mxu0 0.0
    %247 = vmatprep.subr.mxu0 0.0
    %248 = vmatpush1.msra.mxu0 0.0
    %249 = vmatprep.subr.mxu0 0.0
    %250 = vmatpush1.msra.mxu0 0.0
    %251 = vmatprep.subr.mxu0 0.0
    %252 = vmatpush1.msra.mxu0 0.0
    %253 = vmatprep.subr.mxu0 0.0
    %254 = vmatpush1.msra.mxu0 0.0
    %255 = vmatprep.subr.mxu0 0.0
    %256 = vmatpush1.msra.mxu0 0.0
    %257 = vmatprep.subr.mxu0 0.0
    %258 = vmatpush1.msra.mxu0 0.0
    %259 = vmatprep.mubr.f32.mxu0 0.0
    %260 = vmatmul.mubr.f32.gmra.mrb[0].mxu0 %v170
    %v261 = vpop.f32.mrb[0].mxu0
    %v262 = vadd.f32 %v193, %v261
    %v263 = vpop.f32.mrb[0].mxu0
    %264 = vmatprep.mubr.f32.mxu0 0.0
    %265 = vmatmul.mubr.f32.gmra.mrb[0].mxu0 %v171
    %v266 = vpop.f32.mrb[0].mxu0
    %v267 = vadd.f32 %v193, %v266
    %v268 = vpop.f32.mrb[0].mxu0
    %269 = vdwg.mxu0
    %270 = vst [vmem:[#allocation9] sm:$0xff] %v262
    %271 = vst [vmem:[#allocation9 + $0x8] sm:$0xff] %v267
    // Predicated region
    $region38: #{tpu_custom_call.1} parent=1 // pred_check
      _
    $region39: #{tpu_custom_call.1} parent=1 // pred_check_branch
      %273 = sbr.rel (0) target = $region41
    $region40: #{tpu_custom_call.1} parent=1 // pred_region
      %s275 = ssub.s32 256, 256
      %276 = vsyncadd [#allocation5], %s275
      %s277 = sshll.u32 [#allocation9], 4
      %s278 = int_to_ptr.vmem [resolvable:$true] %s277
      %283 = dma.vmem_to_hbm [thread:$0]  %s278, 256, %s5, [#allocation5], 128, 128, 8
    $region41: #{tpu_custom_call.1} parent=1 // pred_fallthru
      _
    // Predicated region
    $region42: #{tpu_custom_call.1} parent=1 // pred_check
      _
    $region43: #{tpu_custom_call.1} parent=1 // pred_check_branch
      %285 = sbr.rel (0) target = $region45
    $region44: #{tpu_custom_call.1} parent=1 // pred_region
      %286 = dma.done [#allocation5], 256
    $region45: #{tpu_custom_call.1} parent=1 // pred_fallthru
      _
    %287 = vsyncpa [#allocation4], 1
    %288 = vsyncpa [#allocation7], 1
    %289 = vsyncpa [#allocation5], 1

</llo_original>
